<compile_context>
chip_gen: v6e
topology: v6e:2x2x1
jax: 0.10.0
libtpu: 0.0.40
codegen_flags: <defaults>
</compile_context>

<pallas_src>
import functools

import jax
import jax.numpy as jnp
from jax.experimental import pallas as pl
from jax.experimental.pallas import tpu as pltpu


# ----------------------------------------------------------------------------
# Helpers: generation-aware VMEM budgets / tile selection
# ----------------------------------------------------------------------------
def _round_up(x, m):
    return ((x + m - 1) // m) * m


def _vmem_budgets():
    """(vmem_limit_bytes, activation_tile_budget_bytes), derived per chip.

    v5e/v6e (128 MiB VMEM)  -> ~96 MiB limit, ~32 MiB tile budget.
    v7x     (64 MiB / TC)   -> ~40 MiB limit, ~13 MiB tile budget.
    Falls back to the v7x numbers so the same code stays safe everywhere.
    """
    mib = 1024 * 1024
    try:
        cap = int(pltpu.get_tpu_info().vmem_capacity_bytes)
    except Exception:
        cap = 64 * mib
    vmem_limit = max(32 * mib, min(int(0.75 * cap), cap - 24 * mib))
    tile_budget = vmem_limit // 3
    return vmem_limit, tile_budget


def _pick_block(hw, col_bytes, budget_bytes):
    """Largest multiple of 128 whose per-tile working set (col_bytes per
    spatial column) fits the budget, preferring divisors of the 128-padded
    spatial extent so no padding / partial tiles are needed."""
    cap = _round_up(hw, 128)
    limit = max(128, (budget_bytes // max(col_bytes, 1)) // 128 * 128)
    limit = min(limit, cap)
    t = limit
    while t >= 128:
        if cap % t == 0:
            return t
        t -= 128
    return 128


@functools.lru_cache(maxsize=1)
def _single_buffer_supported():
    """True iff this JAX build accepts pipeline_mode=pl.Buffered(1) on TPU."""
    def _probe(x_ref, o_ref):
        o_ref[...] = x_ref[...] + 1.0

    try:
        fn = pl.pallas_call(
            _probe,
            out_shape=jax.ShapeDtypeStruct((8, 128), jnp.float32),
            grid=(1,),
            in_specs=[pl.BlockSpec((8, 128), lambda i: (0, 0),
                                   pipeline_mode=pl.Buffered(1))],
            out_specs=pl.BlockSpec((8, 128), lambda i: (0, 0)),
        )
        jax.block_until_ready(fn(jnp.zeros((8, 128), jnp.float32)))
        return True
    except Exception:
        return False


# ----------------------------------------------------------------------------
# Kernels
# ----------------------------------------------------------------------------
def _ffm_sum_kernel(fsp_ref, fcp_ref, w1_ref, bias_ref, sum_ref, *,
                    dot_dtype, block_hw, hw_valid, need_mask):
    """Pass 1: per-(batch, hw-chunk) channel sums of feat = relu(w1@[fsp;fcp]+b).

    Grid: (N, n_outer, n_inner); the inner axis is 'arbitrary' (sequential)
    and accumulates directly into the resident output block (partial sums).
    """
    t = pl.program_id(2)

    @pl.when(t == 0)
    def _():
        sum_ref[...] = jnp.zeros(sum_ref.shape, sum_ref.dtype)

    # Fused 1x1 conv: single K=Cin dot on the in-VMEM concatenated tile.
    x = jnp.concatenate([fsp_ref[0], fcp_ref[0]], axis=0)          # (Cin, T)
    feat = jnp.dot(w1_ref[...].astype(dot_dtype), x.astype(dot_dtype),
                   preferred_element_type=jnp.float32)
    feat = jnp.maximum(feat + bias_ref[...], 0.0)                  # (Cout, T)

    if need_mask:
        # Spatial extent was padded to the tile grid: zero padded columns so
        # they do not pollute the global average.
        base = (pl.program_id(1) * pl.num_programs(2) + t) * block_hw
        cols = base + jax.lax.broadcasted_iota(jnp.int32, feat.shape, 1)
        feat = jnp.where(cols < hw_valid, feat, 0.0)

    # Column sum on the MXU (feat @ ones) instead of an XLU cross-lane reduce.
    ones_col = jnp.ones((block_hw, 1), dtype=dot_dtype)
    sum_ref[0, 0] += jnp.dot(feat.astype(dot_dtype), ones_col,
                             preferred_element_type=jnp.float32)   # (Cout, 1)


def _ffm_apply_kernel(sums_ref, fsp_ref, fcp_ref, w1_ref, bias_ref,
                      w2_ref, w3_ref, o_ref, *, dot_dtype, inv_hw):
    """Pass 2: combine partial sums -> attention MLP -> recompute feat tile ->
    write feat * (1 + atten) in NCHW layout (lane-dense output)."""
    # Tiny attention MLP per tile (a few K flops; negligible vs the main dot).
    avg = (jnp.sum(sums_ref[0], axis=0) * inv_hw).astype(dot_dtype)  # (Cout, 1)
    a = jnp.dot(w2_ref[...].astype(dot_dtype), avg,
                preferred_element_type=jnp.float32)
    a = jnp.maximum(a, 0.0).astype(dot_dtype)                        # (Cmid, 1)
    a = jnp.dot(w3_ref[...].astype(dot_dtype), a,
                preferred_element_type=jnp.float32)
    att = jax.nn.sigmoid(a) + 1.0                                    # (Cout, 1)

    # Recompute feat for this tile (cheaper than round-tripping it via HBM
    # on v6e/v7x) and apply feat * (1 + atten) == feat*atten + feat.
    x = jnp.concatenate([fsp_ref[0], fcp_ref[0]], axis=0)            # (Cin, T)
    feat = jnp.dot(w1_ref[...].astype(dot_dtype), x.astype(dot_dtype),
                   preferred_element_type=jnp.float32)
    feat = jnp.maximum(feat + bias_ref[...], 0.0)                    # (Cout, T)
    o_ref[0] = (feat * att).astype(o_ref.dtype)


# ----------------------------------------------------------------------------
# Wrapper
# ----------------------------------------------------------------------------
def feature_fusion_forward(fsp, fcp, params, *, dot_dtype=jnp.bfloat16,
                           block_hw=None, block_hw_reduce=None):
    """fsp, fcp: NCHW float32.  Returns NCHW float32 (no transposes anywhere).

    dot_dtype=jnp.bfloat16 (default) runs the MXU in bf16 with f32 accumulate;
    pass jnp.float32 for bit-faithful eval-mode semantics.
    """
    w1, gamma, beta, rmean, rvar, w2, w3 = params
    N, C1, H, W = fsp.shape
    C2 = fcp.shape[1]
    Cout, Cin = w1.shape
    Cmid = w2.shape[0]
    HW = H * W
    assert Cin == C1 + C2

    # Fold eval-mode BN into the 1x1 conv weight / bias (concat never built in HBM).
    eps = 1e-5
    scale = gamma / jnp.sqrt(rvar + eps)                           # (Cout,)
    bias = (beta - rmean * scale).reshape(Cout, 1)                 # (Cout, 1)
    w1f = (w1 * scale[:, None]).astype(jnp.float32)                # (Cout, Cin)

    # Native NCHW with spatial flattened (pure reshape, no data movement).
    xa = fsp.reshape(N, C1, HW)
    xb = fcp.reshape(N, C2, HW)

    vmem_limit, tile_budget = _vmem_budgets()

    # Per-spatial-column f32 VMEM bytes (double-buffered inputs, output tile,
    # in-kernel concat / cast temporaries), used to size the tiles.
    col_bytes_apply = 4 * (3 * Cin + 4 * Cout)
    col_bytes_reduce = 4 * (3 * Cin + 2 * Cout)

    hw_cap = _round_up(HW, 128)

    # Apply-pass tile (constrained by its lane-dense output double buffer).
    if block_hw is not None:
        blk_a = min(hw_cap, max(128, (int(block_hw) // 128) * 128))
    else:
        blk_a = _pick_block(HW, col_bytes_apply, tile_budget)
    n_apply = -(-HW // blk_a)                                      # cdiv
    hw_pad = n_apply * blk_a

    # Reduce-pass tile: a multiple of blk_a (so both passes share one padded
    # extent); it can be larger since pass 1 has no big output tile.
    if block_hw_reduce is not None:
        blk_r = max(blk_a, (int(block_hw_reduce) // blk_a) * blk_a)
        if hw_pad % blk_r != 0:
            blk_r = blk_a
    else:
        k_max = max(1, min((tile_budget // col_bytes_reduce) // blk_a, n_apply))
        k = 1
        for cand in range(k_max, 0, -1):
            if n_apply % cand == 0:
                k = cand
                break
        blk_r = k * blk_a
    n_red = hw_pad // blk_r

    # Split pass 1's spatial tiles into parallel chunks (keeps both v7x
    # TensorCores busy even when N == 1); partial sums combined in pass 2.
    n_outer = 2 if (n_red >= 2 and n_red % 2 == 0) else 1
    n_inner = n_red // n_outer

    need_pad = hw_pad != HW
    if need_pad:
        pad = hw_pad - HW
        xa = jnp.pad(xa, ((0, 0), (0, 0), (0, pad)))
        xb = jnp.pad(xb, ((0, 0), (0, 0), (0, pad)))

    single_buf = _single_buffer_supported()

    def const_spec(shape):
        # Grid-invariant operand: constant index_map (never re-DMA'd); single
        # VMEM buffer when the build supports pl.Buffered(1).
        if single_buf:
            return pl.BlockSpec(shape, lambda *_: (0,) * len(shape),
                                pipeline_mode=pl.Buffered(1))
        return pl.BlockSpec(shape, lambda *_: (0,) * len(shape))

    # ---- Pass 1: partial channel sums of feat over HW chunks ---------------
    sum_kernel = functools.partial(
        _ffm_sum_kernel, dot_dtype=dot_dtype, block_hw=blk_r,
        hw_valid=HW, need_mask=need_pad)

    sums = pl.pallas_call(
        sum_kernel,
        out_shape=jax.ShapeDtypeStruct((N, n_outer, Cout, 1), jnp.float32),
        grid_spec=pltpu.PrefetchScalarGridSpec(
            num_scalar_prefetch=0,
            grid=(N, n_outer, n_inner),
            in_specs=[
                pl.BlockSpec((1, C1, blk_r),
                             lambda b, c, t: (b, 0, c * n_inner + t)),
                pl.BlockSpec((1, C2, blk_r),
                             lambda b, c, t: (b, 0, c * n_inner + t)),
                const_spec((Cout, Cin)),
                const_spec((Cout, 1)),
            ],
            out_specs=pl.BlockSpec((1, 1, Cout, 1),
                                   lambda b, c, t: (b, c, 0, 0)),
        ),
        compiler_params=pltpu.CompilerParams(
            dimension_semantics=("parallel", "parallel", "arbitrary"),
            vmem_limit_bytes=vmem_limit,
        ),
    )(xa, xb, w1f, bias)

    # ---- Pass 2: attention MLP + recompute feat + scaled write (NCHW) ------
    apply_kernel = functools.partial(
        _ffm_apply_kernel, dot_dtype=dot_dtype, inv_hw=1.0 / float(HW))

    out = pl.pallas_call(
        apply_kernel,
        out_shape=jax.ShapeDtypeStruct((N, Cout, hw_pad), jnp.float32),
        grid_spec=pltpu.PrefetchScalarGridSpec(
            num_scalar_prefetch=0,
            grid=(N, n_apply),
            in_specs=[
                pl.BlockSpec((1, n_outer, Cout, 1), lambda b, t: (b, 0, 0, 0)),
                pl.BlockSpec((1, C1, blk_a), lambda b, t: (b, 0, t)),
                pl.BlockSpec((1, C2, blk_a), lambda b, t: (b, 0, t)),
                const_spec((Cout, Cin)),
                const_spec((Cout, 1)),
                const_spec((Cmid, Cout)),
                const_spec((Cout, Cmid)),
            ],
            out_specs=pl.BlockSpec((1, Cout, blk_a), lambda b, t: (b, 0, t)),
        ),
        compiler_params=pltpu.CompilerParams(
            dimension_semantics=("parallel", "parallel"),
            vmem_limit_bytes=vmem_limit,
        ),
    )(sums, xa, xb, w1f, bias, w2, w3)

    if need_pad:
        out = out[:, :, :HW]
    return out.reshape(N, Cout, H, W)


# ----------------------------------------------------------------------------
# Parameters + pure-JAX reference
# ----------------------------------------------------------------------------
def init_params(key, in_chan, out_chan):
    """Raw module parameters (kaiming_normal_(a=1): std = 1/sqrt(fan_in))."""
    mid = out_chan // 4
    k1, k2, k3, k4, k5, k6, k7 = jax.random.split(key, 7)

    w1 = jax.random.normal(k1, (out_chan, in_chan), jnp.float32) / jnp.sqrt(
        jnp.float32(in_chan))
    w2 = jax.random.normal(k2, (mid, out_chan), jnp.float32) / jnp.sqrt(
        jnp.float32(out_chan))
    w3 = jax.random.normal(k3, (out_chan, mid), jnp.float32) / jnp.sqrt(
        jnp.float32(mid))

    gamma = 1.0 + 0.1 * jax.random.normal(k4, (out_chan,), jnp.float32)
    beta = 0.1 * jax.random.normal(k5, (out_chan,), jnp.float32)
    rmean = 0.05 * jax.random.normal(k6, (out_chan,), jnp.float32)
    rvar = 1.0 + 0.1 * jnp.abs(jax.random.normal(k7, (out_chan,), jnp.float32))

    return (w1, gamma, beta, rmean, rvar, w2, w3)


def feature_fusion_reference(fsp, fcp, params):
    """Pure-JAX eval-mode reference of FeatureFusionModule.forward (NCHW)."""
    w1, gamma, beta, rmean, rvar, w2, w3 = params
    eps = 1e-5
    scale = gamma / jnp.sqrt(rvar + eps)
    bias = beta - rmean * scale
    fcat = jnp.concatenate([fsp, fcp], axis=1)                     # (N,Cin,H,W)
    w1f = w1 * scale[:, None]                                      # folded BN
    feat = jnp.einsum("oc,nchw->nohw", w1f, fcat) + bias[None, :, None, None]
    feat = jnp.maximum(feat, 0.0)                                  # (N,Cout,H,W)
    avg = jnp.mean(feat, axis=(2, 3))                              # (N,Cout)
    a = jnp.maximum(jnp.einsum("mo,no->nm", w2, avg), 0.0)         # (N,Cmid)
    atten = jax.nn.sigmoid(jnp.einsum("om,nm->no", w3, a))         # (N,Cout)
    feat_atten = feat * atten[:, :, None, None]
    return feat_atten + feat


if __name__ == "__main__":
    key = jax.random.PRNGKey(0)
    k_fsp, k_fcp, k_par = jax.random.split(key, 3)

    N = 2
    C_fsp, C_fcp = 32, 32          # in_chan = 64
    out_chan = 64                  # out_chan // 4 = 16
    params = init_params(k_par, C_fsp + C_fcp, out_chan)

    # --- Test A: exact f32 path, auto tiling ---------------------------------
    H, W = 16, 16
    fsp = jax.random.normal(k_fsp, (N, C_fsp, H, W), jnp.float32)
    fcp = jax.random.normal(k_fcp, (N, C_fcp, H, W), jnp.float32)
    ref = feature_fusion_reference(fsp, fcp, params)
    out = jax.block_until_ready(
        feature_fusion_forward(fsp, fcp, params, dot_dtype=jnp.float32))
    assert out.shape == (N, out_chan, H, W)
    assert jnp.allclose(out, ref, atol=1e-4, rtol=1e-4), "f32 path mismatch"

    # --- Test B: bf16 fast path, forced multi-tile + 2-way HW chunk split ----
    H, W = 32, 32
    fsp = jax.random.normal(jax.random.fold_in(k_fsp, 1),
                            (N, C_fsp, H, W), jnp.float32)
    fcp = jax.random.normal(jax.random.fold_in(k_fcp, 1),
                            (N, C_fcp, H, W), jnp.float32)
    ref = feature_fusion_reference(fsp, fcp, params)
    out = jax.block_until_ready(
        feature_fusion_forward(fsp, fcp, params, dot_dtype=jnp.bfloat16,
                               block_hw=128, block_hw_reduce=128))
    assert out.shape == (N, out_chan, H, W)
    assert jnp.allclose(out, ref, atol=5e-2, rtol=5e-2), "bf16 path mismatch"

    # --- Test C: non-128-divisible spatial size (padding + masked reduce) ----
    H, W = 15, 10
    fsp = jax.random.normal(jax.random.fold_in(k_fsp, 2),
                            (N, C_fsp, H, W), jnp.float32)
    fcp = jax.random.normal(jax.random.fold_in(k_fcp, 2),
                            (N, C_fcp, H, W), jnp.float32)
    ref = feature_fusion_reference(fsp, fcp, params)
    out = jax.block_until_ready(
        feature_fusion_forward(fsp, fcp, params, dot_dtype=jnp.bfloat16,
                               block_hw=128, block_hw_reduce=128))
    assert out.shape == (N, out_chan, H, W)
    assert jnp.allclose(out, ref, atol=5e-2, rtol=5e-2), "padded path mismatch"

    print("KERNEL_OK")
</pallas_src>

<mosaic_0001>
module attributes {stable_mosaic.version = 11 : i64} {
  func.func @_probe(%arg0: i32, %arg1: memref<8x128xf32, #tpu.memory_space<vmem>>, %arg2: memref<8x128xf32, #tpu.memory_space<vmem>>) attributes {dimension_semantics = [#tpu.dimension_semantics<arbitrary>], iteration_bounds = array<i64: 1>, scalar_prefetch = 0 : i64, scratch_operands = 0 : i64, tpu.core_type = #tpu.core_type<tc>, window_params = [{pipeline_mode = #tpu.pipeline_mode<synchronous>, transform_indices = @transform_0, window_bounds = array<i64: 8, 128>}, {pipeline_mode = #tpu.pipeline_mode<synchronous>, transform_indices = @transform_1, window_bounds = array<i64: 8, 128>}]} {
    %c0 = arith.constant 0 : index
    %c0_0 = arith.constant 0 : index
    %0 = vector.load %arg1[%c0, %c0_0] : memref<8x128xf32, #tpu.memory_space<vmem>>, vector<8x128xf32>
    %cst = arith.constant 1.000000e+00 : f32
    %1 = vector.broadcast %cst : f32 to vector<8x128xf32>
    %2 = arith.addf %0, %1 : vector<8x128xf32>
    %c0_1 = arith.constant 0 : index
    %c0_2 = arith.constant 0 : index
    %3 = vector.load %arg2[%c0_1, %c0_2] : memref<8x128xf32, #tpu.memory_space<vmem>>, vector<8x128xf32>
    tpu.vector_store %arg2[%c0_1, %c0_2], %2 {strides = array<i32>} : memref<8x128xf32, #tpu.memory_space<vmem>>, vector<8x128xf32>,
    return
  }
  func.func @transform_0(%arg0: i32) -> (i32, i32) {
    %c0_i32 = arith.constant 0 : i32
    %c0_i32_0 = arith.constant 0 : i32
    %c0_i32_1 = arith.constant 0 : i32
    return %c0_i32, %c0_i32_0 : i32, i32
  }
  func.func @transform_1(%arg0: i32) -> (i32, i32) {
    %c0_i32 = arith.constant 0 : i32
    %c0_i32_0 = arith.constant 0 : i32
    %c0_i32_1 = arith.constant 0 : i32
    return %c0_i32, %c0_i32_0 : i32, i32
  }
}

module attributes {stable_mosaic.version = 11 : i64} {
  func.func @_ffm_sum_kernel(%arg0: i32, %arg1: i32, %arg2: i32, %arg3: memref<1x32x256xf32, #tpu.memory_space<vmem>>, %arg4: memref<1x32x256xf32, #tpu.memory_space<vmem>>, %arg5: memref<64x64xf32, #tpu.memory_space<vmem>>, %arg6: memref<64x1xf32, #tpu.memory_space<vmem>>, %arg7: memref<1x1x64x1xf32, #tpu.memory_space<vmem>>) attributes {dimension_semantics = [#tpu.dimension_semantics<parallel>, #tpu.dimension_semantics<parallel>, #tpu.dimension_semantics<arbitrary>], iteration_bounds = array<i64: 2, 1, 1>, scalar_prefetch = 0 : i64, scratch_operands = 0 : i64, tpu.core_type = #tpu.core_type<tc>, window_params = [{transform_indices = @transform_0, window_bounds = array<i64: 1, 32, 256>}, {transform_indices = @transform_1, window_bounds = array<i64: 1, 32, 256>}, {pipeline_mode = #tpu.pipeline_mode<synchronous>, transform_indices = @transform_2, window_bounds = array<i64: 64, 64>}, {pipeline_mode = #tpu.pipeline_mode<synchronous>, transform_indices = @transform_3, window_bounds = array<i64: 64, 1>}, {transform_indices = @transform_4, window_bounds = array<i64: 1, 1, 64, 1>}]} {
    %c0_i32 = arith.constant 0 : i32
    %0 = arith.cmpi eq, %arg2, %c0_i32 : i32
    %1 = arith.extui %0 : i1 to i32
    %c0_i32_0 = arith.constant 0 : i32
    %2 = arith.cmpi ne, %1, %c0_i32_0 : i32
    scf.if %2 {
      %cst_21 = arith.constant 0.000000e+00 : f32
      %23 = vector.broadcast %cst_21 : f32 to vector<1x1x64x1xf32>
      %c0_22 = arith.constant 0 : index
      %c0_23 = arith.constant 0 : index
      %c0_24 = arith.constant 0 : index
      %c0_25 = arith.constant 0 : index
      %24 = vector.load %arg7[%c0_22, %c0_23, %c0_24, %c0_25] : memref<1x1x64x1xf32, #tpu.memory_space<vmem>>, vector<1x1x64x1xf32>
      tpu.vector_store %arg7[%c0_22, %c0_23, %c0_24, %c0_25], %23 {strides = array<i32>} : memref<1x1x64x1xf32, #tpu.memory_space<vmem>>, vector<1x1x64x1xf32>,
    } else {
    }
    %c0 = arith.constant 0 : index
    %c0_1 = arith.constant 0 : index
    %c0_2 = arith.constant 0 : index
    %3 = vector.load %arg3[%c0, %c0_1, %c0_2] : memref<1x32x256xf32, #tpu.memory_space<vmem>>, vector<1x32x256xf32>
    %4 = vector.shape_cast %3 : vector<1x32x256xf32> to vector<32x256xf32>
    %c0_3 = arith.constant 0 : index
    %c0_4 = arith.constant 0 : index
    %c0_5 = arith.constant 0 : index
    %5 = vector.load %arg4[%c0_3, %c0_4, %c0_5] : memref<1x32x256xf32, #tpu.memory_space<vmem>>, vector<1x32x256xf32>
    %6 = vector.shape_cast %5 : vector<1x32x256xf32> to vector<32x256xf32>
    %7 = tpu.concatenate %4, %6 in 0 : vector<32x256xf32>, vector<32x256xf32> -> vector<64x256xf32>
    %c0_6 = arith.constant 0 : index
    %c0_7 = arith.constant 0 : index
    %8 = vector.load %arg5[%c0_6, %c0_7] : memref<64x64xf32, #tpu.memory_space<vmem>>, vector<64x64xf32>
    %cst = arith.constant dense<0.000000e+00> : vector<64x256xf32>
    %9 = tpu.matmul %8, %7, %cst {dimension_numbers = #tpu.dot_dimension_numbers<[1], [0], [0], [1], [0, 0, 1, 1], [], []>} : vector<64x64xf32>, vector<64x256xf32>, vector<64x256xf32> -> vector<64x256xf32>
    %c0_8 = arith.constant 0 : index
    %c0_9 = arith.constant 0 : index
    %10 = vector.load %arg6[%c0_8, %c0_9] : memref<64x1xf32, #tpu.memory_space<vmem>>, vector<64x1xf32>
    %11 = vector.broadcast %10 : vector<64x1xf32> to vector<64x256xf32>
    %12 = arith.addf %9, %11 : vector<64x256xf32>
    %cst_10 = arith.constant 0.000000e+00 : f32
    %13 = vector.broadcast %cst_10 : f32 to vector<64x256xf32>
    %14 = arith.maximumf %12, %13 : vector<64x256xf32>
    %cst_11 = arith.constant 1.000000e+00 : f32
    %15 = vector.broadcast %cst_11 : f32 to vector<256x1xf32>
    %c0_12 = arith.constant 0 : index
    %c0_13 = arith.constant 0 : index
    %c0_14 = arith.constant 0 : index
    %c0_15 = arith.constant 0 : index
    %16 = vector.load %arg7[%c0_12, %c0_13, %c0_14, %c0_15] : memref<1x1x64x1xf32, #tpu.memory_space<vmem>>, vector<1x1x64x1xf32>
    %17 = vector.shape_cast %16 : vector<1x1x64x1xf32> to vector<64x1xf32>
    %cst_16 = arith.constant dense<0.000000e+00> : vector<64x1xf32>
    %18 = tpu.matmul %14, %15, %cst_16 {dimension_numbers = #tpu.dot_dimension_numbers<[1], [0], [0], [1], [0, 0, 1, 1], [], []>} : vector<64x256xf32>, vector<256x1xf32>, vector<64x1xf32> -> vector<64x1xf32>
    %19 = arith.addf %17, %18 : vector<64x1xf32>
    %c0_17 = arith.constant 0 : index
    %c0_18 = arith.constant 0 : index
    %c0_19 = arith.constant 0 : index
    %c0_20 = arith.constant 0 : index
    %20 = vector.load %arg7[%c0_17, %c0_18, %c0_19, %c0_20] : memref<1x1x64x1xf32, #tpu.memory_space<vmem>>, vector<1x1x64x1xf32>
    %21 = vector.shape_cast %20 : vector<1x1x64x1xf32> to vector<64x1xf32>
    %22 = vector.shape_cast %19 : vector<64x1xf32> to vector<1x1x64x1xf32>
    tpu.vector_store %arg7[%c0_17, %c0_18, %c0_19, %c0_20], %22 {strides = array<i32>} : memref<1x1x64x1xf32, #tpu.memory_space<vmem>>, vector<1x1x64x1xf32>,
    return
  }
  func.func @transform_0(%arg0: i32, %arg1: i32, %arg2: i32) -> (i32, i32, i32) {
    %c1_i32 = arith.constant 1 : i32
    %0 = arith.muli %arg1, %c1_i32 : i32
    %1 = arith.addi %0, %arg2 : i32
    %c0_i32 = arith.constant 0 : i32
    %c0_i32_0 = arith.constant 0 : i32
    return %arg0, %c0_i32, %1 : i32, i32, i32
  }
  func.func @transform_1(%arg0: i32, %arg1: i32, %arg2: i32) -> (i32, i32, i32) {
    %c1_i32 = arith.constant 1 : i32
    %0 = arith.muli %arg1, %c1_i32 : i32
    %1 = arith.addi %0, %arg2 : i32
    %c0_i32 = arith.constant 0 : i32
    %c0_i32_0 = arith.constant 0 : i32
    return %arg0, %c0_i32, %1 : i32, i32, i32
  }
  func.func @transform_2(%arg0: i32, %arg1: i32, %arg2: i32) -> (i32, i32) {
    %c0_i32 = arith.constant 0 : i32
    %c0_i32_0 = arith.constant 0 : i32
    %c0_i32_1 = arith.constant 0 : i32
    return %c0_i32, %c0_i32_0 : i32, i32
  }
  func.func @transform_3(%arg0: i32, %arg1: i32, %arg2: i32) -> (i32, i32) {
    %c0_i32 = arith.constant 0 : i32
    %c0_i32_0 = arith.constant 0 : i32
    %c0_i32_1 = arith.constant 0 : i32
    return %c0_i32, %c0_i32_0 : i32, i32
  }
  func.func @transform_4(%arg0: i32, %arg1: i32, %arg2: i32) -> (i32, i32, i32, i32) {
    %c0_i32 = arith.constant 0 : i32
    %c0_i32_0 = arith.constant 0 : i32
    %c0_i32_1 = arith.constant 0 : i32
    return %arg0, %arg1, %c0_i32, %c0_i32_0 : i32, i32, i32, i32
  }
}

</mosaic_0001>

<llo_original>
// kernel: tpu_custom_call.1
$region0: #{tpu_custom_call.1}
  #allocation0 [shape = 'u32[]', space=smem, size = 0x4, offset = 0x4, fixed_abs, tag = 'smem constant byte address 0x4 - core index']
  #allocation1 [shape = 'u32[144,128]{1,0:T(1,128)}', space=vmem, size = 0x12000, scoped, tag = 'internal scratch']
  %s0 = inlined_call_operand.hbm [shape: f32[8,128], index: 0, kind: input, shape index: {}]
  %s1 = inlined_call_operand.hbm [shape: f32[8,128], index: 1, kind: output, shape index: {}]
  %s2 = sld [smem:[#allocation0]]
  $region18: #{tpu_custom_call.1} parent=0
    _
  %s4 = ssub.s32 1, %s2
  %s5 = scalar_select 0, %s4, %s2
  $region1: #{tpu_custom_call.1} parent=0
    #allocation2 [shape = 'u8[4096]{0}', space=vmem, size = 0x1000, scoped, tag = 'input window, operand 0, single buffered']
    #allocation3 [shape = 's32[1]{0}', space=sflag, size = 0x4, scoped, tag = 'scoped memory for tpu_custom_call.1']
    #allocation4 [shape = 's32[1]{0}', space=sflag, size = 0x4, scoped, tag = 'scoped memory for tpu_custom_call.1']
    #allocation5 [shape = 'u8[4096]{0}', space=vmem, size = 0x1000, scoped, tag = 'output window, operand 0, single buffered']
    %6 = vsyncpa [#allocation3], 0
    %7 = vsyncpa [#allocation4], 0
    // Predicated region
    $region2: #{tpu_custom_call.1} parent=1 // pred_check
      _
    $region3: #{tpu_custom_call.1} parent=1 // pred_check_branch
      %9 = sbr.rel (0) target = $region5
    $region4: #{tpu_custom_call.1} parent=1 // pred_region
      %s11 = ssub.s32 128, 128
      %12 = vsyncadd [#allocation3], %s11
      %s14 = sshll.u32 [#allocation2], 4
      %s15 = int_to_ptr.vmem [resolvable:$true] %s14
      %17 = dma.hbm_to_vmem [thread:$0]  %s0, 128, %s15, [#allocation3]
    $region5: #{tpu_custom_call.1} parent=1 // pred_fallthru
      _
    // Predicated region
    $region6: #{tpu_custom_call.1} parent=1 // pred_check
      _
    $region7: #{tpu_custom_call.1} parent=1 // pred_check_branch
      %19 = sbr.rel (0) target = $region9
    $region8: #{tpu_custom_call.1} parent=1 // pred_region
      %20 = dma.done [#allocation3], 128
    $region9: #{tpu_custom_call.1} parent=1 // pred_fallthru
      _
    %v21 = vld [vmem:[#allocation2] sm:$0xff]
    %v22 = vadd.f32 %v21, 1.0
    %23 = vst [vmem:[#allocation5] sm:$0xff] %v22
    // Predicated region
    $region10: #{tpu_custom_call.1} parent=1 // pred_check
      _
    $region11: #{tpu_custom_call.1} parent=1 // pred_check_branch
      %25 = sbr.rel (0) target = $region13
    $region12: #{tpu_custom_call.1} parent=1 // pred_region
      %s27 = ssub.s32 128, 128
      %28 = vsyncadd [#allocation4], %s27
      %s30 = sshll.u32 [#allocation5], 4
      %s31 = int_to_ptr.vmem [resolvable:$true] %s30
      %33 = dma.vmem_to_hbm [thread:$0]  %s31, 128, %s1, [#allocation4]
    $region13: #{tpu_custom_call.1} parent=1 // pred_fallthru
      _
    // Predicated region
    $region14: #{tpu_custom_call.1} parent=1 // pred_check
      _
    $region15: #{tpu_custom_call.1} parent=1 // pred_check_branch
      %35 = sbr.rel (0) target = $region17
    $region16: #{tpu_custom_call.1} parent=1 // pred_region
      %36 = dma.done [#allocation4], 128
    $region17: #{tpu_custom_call.1} parent=1 // pred_fallthru
      _
    %37 = vsyncpa [#allocation3], 1
    %38 = vsyncpa [#allocation4], 1

// kernel: tpu_custom_call.1
$region0: #{tpu_custom_call.1}
  #allocation0 [shape = 'u32[]', space=smem, size = 0x4, offset = 0x4, fixed_abs, tag = 'smem constant byte address 0x4 - core index']
  #allocation1 [shape = 'u32[144,128]{1,0:T(1,128)}', space=vmem, size = 0x12000, scoped, tag = 'internal scratch']
  %s0 = inlined_call_operand.hbm [shape: f32[2,32,256], index: 0, kind: input, shape index: {}]
  %s1 = inlined_call_operand.hbm [shape: f32[2,32,256], index: 1, kind: input, shape index: {}]
  %s2 = inlined_call_operand.vmem [shape: f32[64,64], index: 2, kind: input, shape index: {}]
  %s3 = inlined_call_operand.vmem [shape: f32[64,1], index: 3, kind: input, shape index: {}]
  %s4 = inlined_call_operand.vmem [shape: f32[2,1,64,1], index: 4, kind: output, shape index: {}]
  %s5 = sld [smem:[#allocation0]]
  $region61: #{tpu_custom_call.1} parent=0
    _
  %s7 = ssub.s32 1, %s5
  %s8 = scalar_select 0, %s7, %s5
  $region1: #{tpu_custom_call.1} parent=0
    #allocation2 [shape = 'u8[65536]{0}', space=vmem, size = 0x10000, scoped, tag = 'input window, operand 0']
    #allocation3 [shape = 's32[2]{0}', space=sflag, size = 0x8, scoped, tag = 'scoped memory for tpu_custom_call.1']
    #allocation4 [shape = 'u8[65536]{0}', space=vmem, size = 0x10000, scoped, tag = 'input window, operand 1']
    #allocation5 [shape = 's32[2]{0}', space=sflag, size = 0x8, scoped, tag = 'scoped memory for tpu_custom_call.1']
    %9 = vsyncpa [#allocation3], 0
    %s10 = scalar_lea.sflag [#allocation3], 1
    %11 = vsyncpa %s10, 0
    %12 = vsyncpa [#allocation5], 0
    %s13 = scalar_lea.sflag [#allocation5], 1
    %14 = vsyncpa %s13, 0
    loop: start=0, step=1, limit=4
    $region2: #{tpu_custom_call.1} parent=1 // loop_pre_header
      _
    $region3: #{tpu_custom_call.1} parent=1 // loop_header
      %s16 = sphi 0, %s20
      %p17 = scmp.ge.s32.totalorder %s16, 4
      %s23 = sphi 0, %s42
      %s24 = sphi 0, %s38
      %s25 = sphi 0, %s34
      %s26 = sphi 0, %s23
      %s27 = sphi 0, %s24
      %s28 = sphi 0, %s25
      %s29 = sphi 0, %s26
      %s30 = sphi 0, %s27
      %s31 = sphi 0, %s28
      %s49 = sphi 0, %s51
      %s52 = sphi 0, %s49
      %s53 = sphi 0, %s52
      %s69 = sphi 0, %s53
      %s79 = sphi 0, %s81
      %s82 = sphi 0, %s79
      %s83 = sphi 0, %s82
      %s99 = sphi 0, %s83
      %s103 = sphi 0, %s103
      %s105 = sphi 0, %s103
      %s106 = sphi 0, %s105
      %s120 = sphi 0, %s106
      %s124 = sphi 0, %s124
      %s126 = sphi 0, %s124
      %s127 = sphi 0, %s126
      %s141 = sphi 0, %s127
      %s149 = sphi 0, %s151
      %s152 = sphi 0, %s149
      %s153 = sphi 0, %s152
      %s169 = sphi 0, %s153
    $region4: #{tpu_custom_call.1} parent=1 // loop_header_branch
      %19 = sbr.rel (%p17) target = $region8
    $region5: #{tpu_custom_call.1} parent=1 // loop_body
      %s21 = ssub.s32 %s16, 1
      %s22 = ssub.s32 %s16, 2
      %s32 = sadd.s32 1, %s25
      %p33 = scmp.ge.s32.totalorder %s32, 1
      %s34 = scalar_select %p33, 0, %s32
      %s35 = sadd.s32 1, %s24
      %s36 = scalar_select %p33, %s35, %s24
      %p37 = scmp.ge.s32.totalorder %s36, 1
      %s38 = scalar_select %p37, 0, %s36
      %s39 = sadd.s32 1, %s23
      %s40 = scalar_select %p37, %s39, %s23
      %p41 = scmp.ge.s32.totalorder %s40, 2
      %s42 = scalar_select %p41, 0, %s40
      %s43 = sadd.s32 %s24, %s25
      %s44 = sadd.s32 %s38, %s34
      %s45 = ssub.s32 %s23, %s42
      %s46 = ssub.s32 %s43, %s44
      %s47 = sor.u32 %s45, %s46
      %p48 = scmp.eq.s32.totalorder %s47, 0
      %s50 = sadd.s32 %s49, 1
      %s51 = scalar_select %p48, %s49, %s50
      %p54 = pneg %p48
      %p55 = scmp.eq.s32.totalorder %s16, 1
      %p56 = por %p54, %p55
      %p57 = scmp.ne.s32.totalorder %s49, %s52
      %p58 = scmp.eq.s32.totalorder %s16, 0
      %p59 = por %p57, %p58
      %p60 = scmp.ne.s32.totalorder %s49, %s52
      %p61 = scmp.eq.s32.totalorder %s21, 1
      %p62 = por %p60, %p61
      %p63 = scmp.ne.s32.totalorder %s52, %s53
      %p64 = scmp.eq.s32.totalorder %s21, 0
      %p65 = por %p63, %p64
      %p66 = scmp.ne.s32.totalorder %s52, %s53
      %p67 = scmp.eq.s32.totalorder %s22, 1
      %p68 = por %p66, %p67
      %p70 = scmp.ne.s32.totalorder %s53, %s69
      %p71 = scmp.eq.s32.totalorder %s22, 0
      %p72 = por %p70, %p71
      %s73 = sadd.s32 %s24, %s25
      %s74 = sadd.s32 %s38, %s34
      %s75 = ssub.s32 %s23, %s42
      %s76 = ssub.s32 %s73, %s74
      %s77 = sor.u32 %s75, %s76
      %p78 = scmp.eq.s32.totalorder %s77, 0
      %s80 = sadd.s32 %s79, 1
      %s81 = scalar_select %p78, %s79, %s80
      %p84 = pneg %p78
      %p85 = scmp.eq.s32.totalorder %s16, 1
      %p86 = por %p84, %p85
      %p87 = scmp.ne.s32.totalorder %s79, %s82
      %p88 = scmp.eq.s32.totalorder %s16, 0
      %p89 = por %p87, %p88
      %p90 = scmp.ne.s32.totalorder %s79, %s82
      %p91 = scmp.eq.s32.totalorder %s21, 1
      %p92 = por %p90, %p91
      %p93 = scmp.ne.s32.totalorder %s82, %s83
      %p94 = scmp.eq.s32.totalorder %s21, 0
      %p95 = por %p93, %p94
      %p96 = scmp.ne.s32.totalorder %s82, %s83
      %p97 = scmp.eq.s32.totalorder %s22, 1
      %p98 = por %p96, %p97
      %p100 = scmp.ne.s32.totalorder %s83, %s99
      %p101 = scmp.eq.s32.totalorder %s22, 0
      %p102 = por %p100, %p101
      %s104 = sadd.s32 %s103, 1
      %p107 = scmp.eq.s32.totalorder %s16, 1
      %p108 = scmp.ne.s32.totalorder %s103, %s105
      %p109 = scmp.eq.s32.totalorder %s16, 0
      %p110 = por %p108, %p109
      %p111 = scmp.ne.s32.totalorder %s103, %s105
      %p112 = scmp.eq.s32.totalorder %s21, 1
      %p113 = por %p111, %p112
      %p114 = scmp.ne.s32.totalorder %s105, %s106
      %p115 = scmp.eq.s32.totalorder %s21, 0
      %p116 = por %p114, %p115
      %p117 = scmp.ne.s32.totalorder %s105, %s106
      %p118 = scmp.eq.s32.totalorder %s22, 1
      %p119 = por %p117, %p118
      %p121 = scmp.ne.s32.totalorder %s106, %s120
      %p122 = scmp.eq.s32.totalorder %s22, 0
      %p123 = por %p121, %p122
      %s125 = sadd.s32 %s124, 1
      %p128 = scmp.eq.s32.totalorder %s16, 1
      %p129 = scmp.ne.s32.totalorder %s124, %s126
      %p130 = scmp.eq.s32.totalorder %s16, 0
      %p131 = por %p129, %p130
      %p132 = scmp.ne.s32.totalorder %s124, %s126
      %p133 = scmp.eq.s32.totalorder %s21, 1
      %p134 = por %p132, %p133
      %p135 = scmp.ne.s32.totalorder %s126, %s127
      %p136 = scmp.eq.s32.totalorder %s21, 0
      %p137 = por %p135, %p136
      %p138 = scmp.ne.s32.totalorder %s126, %s127
      %p139 = scmp.eq.s32.totalorder %s22, 1
      %p140 = por %p138, %p139
      %p142 = scmp.ne.s32.totalorder %s127, %s141
      %p143 = scmp.eq.s32.totalorder %s22, 0
      %p144 = por %p142, %p143
      %s145 = ssub.s32 %s23, %s42
      %s146 = ssub.s32 %s24, %s38
      %s147 = sor.u32 %s145, %s146
      %p148 = scmp.eq.s32.totalorder %s147, 0
      %s150 = sadd.s32 %s149, 1
      %s151 = scalar_select %p148, %s149, %s150
      %p154 = pneg %p148
      %p155 = scmp.eq.s32.totalorder %s16, 1
      %p156 = por %p154, %p155
      %p157 = scmp.ne.s32.totalorder %s149, %s152
      %p158 = scmp.eq.s32.totalorder %s16, 0
      %p159 = por %p157, %p158
      %p160 = scmp.ne.s32.totalorder %s149, %s152
      %p161 = scmp.eq.s32.totalorder %s21, 1
      %p162 = por %p160, %p161
      %p163 = scmp.ne.s32.totalorder %s152, %s153
      %p164 = scmp.eq.s32.totalorder %s21, 0
      %p165 = por %p163, %p164
      %p166 = scmp.ne.s32.totalorder %s152, %s153
      %p167 = scmp.eq.s32.totalorder %s22, 1
      %p168 = por %p166, %p167
      %p170 = scmp.ne.s32.totalorder %s153, %s169
      %p171 = scmp.eq.s32.totalorder %s22, 0
      %p172 = por %p170, %p171
      %p173 = scmp.le.s32.totalorder 1, %s16
      %p174 = scmp.lt.s32.totalorder %s16, 3
      %p175 = pnand %p173, %p174
      %p176 = pneg %p175
      // Predicated region
      $region9: #{tpu_custom_call.1} parent=5 // pred_check
        _
      $region10: #{tpu_custom_call.1} parent=5 // pred_check_branch
        %178 = sbr.rel (%p175) target = $region12
      $region11: #{tpu_custom_call.1} parent=5 // pred_region
        %s179 = ssub.s32 %s16, 1
        // Predicated region
        $region13: #{tpu_custom_call.1} parent=11 // pred_check
          %p180 = pneg %p116
        $region14: #{tpu_custom_call.1} parent=11 // pred_check_branch
          %182 = sbr.rel (%p180) target = $region16
        $region15: #{tpu_custom_call.1} parent=11 // pred_region
          _
        $region16: #{tpu_custom_call.1} parent=11 // pred_fallthru
          _
        // Predicated region
        $region17: #{tpu_custom_call.1} parent=11 // pred_check
          %p183 = pneg %p137
        $region18: #{tpu_custom_call.1} parent=11 // pred_check_branch
          %185 = sbr.rel (%p183) target = $region20
        $region19: #{tpu_custom_call.1} parent=11 // pred_region
          _
        $region20: #{tpu_custom_call.1} parent=11 // pred_fallthru
          _
      $region12: #{tpu_custom_call.1} parent=5 // pred_fallthru
        _
      %p186 = scmp.lt.s32.totalorder %s16, 2
      // Predicated region
      $region21: #{tpu_custom_call.1} parent=5 // pred_check
        %p187 = pneg %p186
      $region22: #{tpu_custom_call.1} parent=5 // pred_check_branch
        %189 = sbr.rel (%p187) target = $region24
      $region23: #{tpu_custom_call.1} parent=5 // pred_region
        // Predicated region
        $region25: #{tpu_custom_call.1} parent=23 // pred_check
          %p190 = pneg %p59
        $region26: #{tpu_custom_call.1} parent=23 // pred_check_branch
          %192 = sbr.rel (%p190) target = $region28
        $region27: #{tpu_custom_call.1} parent=23 // pred_region
          %s193 = sand.u32 %s49, 1
          %s194 = scalar_lea.sflag [#allocation3], %s193
          %s195 = sand.u32 %s49, 1
          %s196 = smul.addr %s195, 64
          %s197 = scalar_lea.vmem [#allocation2], %s196
          %s198 = sadd.s32 %s24, %s25
          %s199 = smul.u32 2, %s198
          %s201 = ssub.s32 1024, 1024
          %202 = vsyncadd %s194, %s201
          %s203 = smul.addr %s23, 8
          %s204 = sadd.s32 %s199, %s203
          %s205 = smul.addr %s204, 128
          %s206 = scalar_lea.hbm %s0, %s205
          %s207 = sshll.u32 %s197, 4
          %s208 = int_to_ptr.vmem [resolvable:$true] %s207
          %213 = dma.hbm_to_vmem [thread:$0]  %s206, 1024, %s208, %s194, 256, 256, 16
        $region28: #{tpu_custom_call.1} parent=23 // pred_fallthru
          _
        // Predicated region
        $region29: #{tpu_custom_call.1} parent=23 // pred_check
          %p214 = pneg %p89
        $region30: #{tpu_custom_call.1} parent=23 // pred_check_branch
          %216 = sbr.rel (%p214) target = $region32
        $region31: #{tpu_custom_call.1} parent=23 // pred_region
          %s217 = sand.u32 %s79, 1
          %s218 = scalar_lea.sflag [#allocation5], %s217
          %s219 = sand.u32 %s79, 1
          %s220 = smul.addr %s219, 64
          %s221 = scalar_lea.vmem [#allocation4], %s220
          %s222 = sadd.s32 %s24, %s25
          %s223 = smul.u32 2, %s222
          %s225 = ssub.s32 1024, 1024
          %226 = vsyncadd %s218, %s225
          %s227 = smul.addr %s23, 8
          %s228 = sadd.s32 %s223, %s227
          %s229 = smul.addr %s228, 128
          %s230 = scalar_lea.hbm %s1, %s229
          %s231 = sshll.u32 %s221, 4
          %s232 = int_to_ptr.vmem [resolvable:$true] %s231
          %237 = dma.hbm_to_vmem [thread:$0]  %s230, 1024, %s232, %s218, 256, 256, 16
        $region32: #{tpu_custom_call.1} parent=23 // pred_fallthru
          _
      $region24: #{tpu_custom_call.1} parent=5 // pred_fallthru
        _
      %p238 = scmp.le.s32.totalorder 1, %s16
      %p239 = scmp.lt.s32.totalorder %s16, 3
      %p240 = pnand %p238, %p239
      %p241 = pneg %p240
      // Predicated region
      $region33: #{tpu_custom_call.1} parent=5 // pred_check
        _
      $region34: #{tpu_custom_call.1} parent=5 // pred_check_branch
        %243 = sbr.rel (%p240) target = $region36
      $region35: #{tpu_custom_call.1} parent=5 // pred_region
        %s244 = ssub.s32 %s16, 1
        %s245 = sand.u32 %s52, 1
        %s246 = scalar_lea.sflag [#allocation3], %s245
        %s247 = sand.u32 %s52, 1
        %s248 = smul.addr %s247, 64
        %s249 = scalar_lea.vmem [#allocation2], %s248
        // Predicated region
        $region37: #{tpu_custom_call.1} parent=35 // pred_check
          %p250 = pneg %p65
        $region38: #{tpu_custom_call.1} parent=35 // pred_check_branch
          %252 = sbr.rel (%p250) target = $region40
        $region39: #{tpu_custom_call.1} parent=35 // pred_region
          %253 = dma.done %s246, 1024
        $region40: #{tpu_custom_call.1} parent=35 // pred_fallthru
          _
        %s254 = sand.u32 %s82, 1
        %s255 = scalar_lea.sflag [#allocation5], %s254
        %s256 = sand.u32 %s82, 1
        %s257 = smul.addr %s256, 64
        %s258 = scalar_lea.vmem [#allocation4], %s257
        // Predicated region
        $region41: #{tpu_custom_call.1} parent=35 // pred_check
          %p259 = pneg %p95
        $region42: #{tpu_custom_call.1} parent=35 // pred_check_branch
          %261 = sbr.rel (%p259) target = $region44
        $region43: #{tpu_custom_call.1} parent=35 // pred_region
          %262 = dma.done %s255, 1024
        $region44: #{tpu_custom_call.1} parent=35 // pred_fallthru
          _
        %s263 = sand.u32 %s52, 1
        %s264 = scalar_lea.sflag [#allocation3], %s263
        %s265 = sand.u32 %s52, 1
        %s266 = smul.addr %s265, 64
        %s267 = scalar_lea.vmem [#allocation2], %s266
        %p268 = pneg %p65
        %p269 = pneg %p62
        %s270 = sand.u32 %s82, 1
        %s271 = scalar_lea.sflag [#allocation5], %s270
        %s272 = sand.u32 %s82, 1
        %s273 = smul.addr %s272, 64
        %s274 = scalar_lea.vmem [#allocation4], %s273
        %p275 = pneg %p95
        %p276 = pneg %p92
        %p277 = pneg %p116
        %p278 = pneg %p113
        %p279 = pneg %p137
        %p280 = pneg %p134
        %p281 = pneg %p165
        %p282 = pneg %p162
        %p283 = scmp.lt.s32.totalorder %s26, 1
        %s284 = scalar_select %p283, %s26, 1
        %p285 = scmp.lt.s32.totalorder %s27, 0
        %s286 = scalar_select %p285, %s27, 0
        %s287 = smul.addr %s286, 8
        %s288 = smul.addr %s284, 8
        %s289 = sadd.s32 %s287, %s288
        %s290 = smul.addr %s289, 8
        %s291 = scalar_lea.vmem %s4, %s290
        %s292 = sadd.s32 %s27, %s28
        %s293 = smul.u32 2, %s292
        %s294 = sadd.s32 %s27, %s28
        %s295 = smul.u32 2, %s294
        %p296 = scmp.lt.s32.totalorder %s26, 1
        %s297 = scalar_select %p296, %s26, 1
        %p298 = scmp.lt.s32.totalorder %s27, 0
        %s299 = scalar_select %p298, %s27, 0
        %s300 = smul.addr %s299, 8
        %s301 = smul.addr %s297, 8
        %s302 = sadd.s32 %s300, %s301
        %s303 = smul.addr %s302, 8
        %s304 = scalar_lea.vmem %s4, %s303
        %p305 = scmp.eq.s32.totalorder %s28, 0
        // Predicated region
        $region45: #{tpu_custom_call.1} parent=35 // pred_check
          %p306 = pneg %p305
        $region46: #{tpu_custom_call.1} parent=35 // pred_check_branch
          %308 = sbr.rel (%p306) target = $region48
        $region47: #{tpu_custom_call.1} parent=35 // pred_region
          %vm309 = vcmask 7168
          %310 = vst.msk [vmem:[%s304] sm:$0xff] %vm309, 0.0
          %311 = vst.msk [vmem:[%s304 + $0x8] sm:$0xff] %vm309, 0.0
          %312 = vst.msk [vmem:[%s304 + $0x10] sm:$0xff] %vm309, 0.0
          %313 = vst.msk [vmem:[%s304 + $0x18] sm:$0xff] %vm309, 0.0
          %314 = vst.msk [vmem:[%s304 + $0x20] sm:$0xff] %vm309, 0.0
          %315 = vst.msk [vmem:[%s304 + $0x28] sm:$0xff] %vm309, 0.0
          %316 = vst.msk [vmem:[%s304 + $0x30] sm:$0xff] %vm309, 0.0
          %317 = vst.msk [vmem:[%s304 + $0x38] sm:$0xff] %vm309, 0.0
        $region48: #{tpu_custom_call.1} parent=35 // pred_fallthru
          _
        %v318 = vld [vmem:[%s249] sm:$0xff]
        %v319 = vld [vmem:[%s249 + $0x8] sm:$0xff]
        %v320 = vld [vmem:[%s249 + $0x10] sm:$0xff]
        %v321 = vld [vmem:[%s249 + $0x18] sm:$0xff]
        %v322 = vld [vmem:[%s249 + $0x20] sm:$0xff]
        %v323 = vld [vmem:[%s249 + $0x28] sm:$0xff]
        %v324 = vld [vmem:[%s249 + $0x30] sm:$0xff]
        %v325 = vld [vmem:[%s249 + $0x38] sm:$0xff]
        %v326 = vld [vmem:[%s258] sm:$0xff]
        %v327 = vld [vmem:[%s258 + $0x8] sm:$0xff]
        %v328 = vld [vmem:[%s258 + $0x10] sm:$0xff]
        %v329 = vld [vmem:[%s258 + $0x18] sm:$0xff]
        %v330 = vld [vmem:[%s258 + $0x20] sm:$0xff]
        %v331 = vld [vmem:[%s258 + $0x28] sm:$0xff]
        %v332 = vld [vmem:[%s258 + $0x30] sm:$0xff]
        %v333 = vld [vmem:[%s258 + $0x38] sm:$0xff]
        %v334 = vld [vmem:[%s2] sm:$0xff]
        %v335 = vld [vmem:[%s2 + $0x8] sm:$0xff]
        %v336 = vld [vmem:[%s2 + $0x10] sm:$0xff]
        %v337 = vld [vmem:[%s2 + $0x18] sm:$0xff]
        %v338 = vld [vmem:[%s2 + $0x20] sm:$0xff]
        %v339 = vld [vmem:[%s2 + $0x28] sm:$0xff]
        %v340 = vld [vmem:[%s2 + $0x30] sm:$0xff]
        %v341 = vld [vmem:[%s2 + $0x38] sm:$0xff]
        %v342 = vld [vmem:[%s3] sm:$0xff]
        %v343 = vld [vmem:[%s3 + $0x8] sm:$0xff]
        %v344 = vld [vmem:[%s3 + $0x10] sm:$0xff]
        %v345 = vld [vmem:[%s3 + $0x18] sm:$0xff]
        %v346 = vld [vmem:[%s3 + $0x20] sm:$0xff]
        %v347 = vld [vmem:[%s3 + $0x28] sm:$0xff]
        %v348 = vld [vmem:[%s3 + $0x30] sm:$0xff]
        %v349 = vld [vmem:[%s3 + $0x38] sm:$0xff]
        %351 = vset.pattern.permute.xlu0 0
        %352 = vperm.xlu0 %351, %v342
        %v353 = vpop.permute.xlu0 %352
        %356 = vset.pattern.permute.xlu0 0
        %357 = vperm.xlu0 %356, %v343
        %v358 = vpop.permute.xlu0 %357
        %361 = vset.pattern.permute.xlu0 0
        %362 = vperm.xlu0 %361, %v344
        %v363 = vpop.permute.xlu0 %362
        %366 = vset.pattern.permute.xlu0 0
        %367 = vperm.xlu0 %366, %v345
        %v368 = vpop.permute.xlu0 %367
        %371 = vset.pattern.permute.xlu0 0
        %372 = vperm.xlu0 %371, %v346
        %v373 = vpop.permute.xlu0 %372
        %376 = vset.pattern.permute.xlu0 0
        %377 = vperm.xlu0 %376, %v347
        %v378 = vpop.permute.xlu0 %377
        %381 = vset.pattern.permute.xlu0 0
        %382 = vperm.xlu0 %381, %v348
        %v383 = vpop.permute.xlu0 %382
        %386 = vset.pattern.permute.xlu0 0
        %387 = vperm.xlu0 %386, %v349
        %v388 = vpop.permute.xlu0 %387
        %vm390 = vcmask 523264
        %v392 = vsel %vm390, %v334, 0
        %v395 = vsel %vm390, %v335, 0
        %v398 = vsel %vm390, %v336, 0
        %v401 = vsel %vm390, %v337, 0
        %v404 = vsel %vm390, %v338, 0
        %v407 = vsel %vm390, %v339, 0
        %v410 = vsel %vm390, %v340, 0
        %v413 = vsel %vm390, %v341, 0
        %415 = vmatprep.subr.mxu0 0.0
        %416 = vmatpush1.msra.mxu0 0.0
        %417 = vmatprep.subr.mxu0 0.0
        %418 = vmatpush1.msra.mxu0 0.0
        %419 = vmatprep.subr.mxu0 0.0
        %420 = vmatpush1.msra.mxu0 0.0
        %421 = vmatprep.subr.mxu0 0.0
        %422 = vmatpush1.msra.mxu0 0.0
        %423 = vmatprep.subr.mxu0 0.0
        %424 = vmatpush1.msra.mxu0 0.0
        %425 = vmatprep.subr.mxu0 0.0
        %426 = vmatpush1.msra.mxu0 0.0
        %427 = vmatprep.subr.mxu0 0.0
        %428 = vmatpush1.msra.mxu0 0.0
        %429 = vmatprep.subr.mxu0 0.0
        %430 = vmatpush1.msra.mxu0 0.0
        %431 = vmatprep.subr.mxu0 %v333
        %432 = vmatpush1.msra.mxu0 %v332
        %433 = vmatprep.subr.mxu0 %v331
        %434 = vmatpush1.msra.mxu0 %v330
        %435 = vmatprep.subr.mxu0 %v329
        %436 = vmatpush1.msra.mxu0 %v328
        %437 = vmatprep.subr.mxu0 %v327
        %438 = vmatpush1.msra.mxu0 %v326
        %439 = vmatprep.subr.mxu0 %v325
        %440 = vmatpush1.msra.mxu0 %v324
        %441 = vmatprep.subr.mxu0 %v323
        %442 = vmatpush1.msra.mxu0 %v322
        %443 = vmatprep.subr.mxu0 %v321
        %444 = vmatpush1.msra.mxu0 %v320
        %445 = vmatprep.subr.mxu0 %v319
        %446 = vmatpush1.msra.mxu0 %v318
        %447 = vmatprep.subr.mxu0 0.0
        %448 = vmatpush2.msra.mxu0 0.0
        %449 = vmatprep.subr.mxu0 0.0
        %450 = vmatpush2.msra.mxu0 0.0
        %451 = vmatprep.subr.mxu0 0.0
        %452 = vmatpush2.msra.mxu0 0.0
        %453 = vmatprep.subr.mxu0 0.0
        %454 = vmatpush2.msra.mxu0 0.0
        %455 = vmatprep.subr.mxu0 0.0
        %456 = vmatpush2.msra.mxu0 0.0
        %457 = vmatprep.subr.mxu0 0.0
        %458 = vmatpush2.msra.mxu0 0.0
        %459 = vmatprep.subr.mxu0 0.0
        %460 = vmatpush2.msra.mxu0 0.0
        %461 = vmatprep.subr.mxu0 0.0
        %462 = vmatpush2.msra.mxu0 0.0
        %463 = vmatprep.subr.mxu0 0.0
        %464 = vmatpush2.msra.mxu0 0.0
        %465 = vmatprep.subr.mxu0 0.0
        %466 = vmatpush2.msra.mxu0 0.0
        %467 = vmatprep.subr.mxu0 0.0
        %468 = vmatpush2.msra.mxu0 0.0
        %469 = vmatprep.subr.mxu0 0.0
        %470 = vmatpush2.msra.mxu0 0.0
        %471 = vmatprep.subr.mxu0 0.0
        %472 = vmatpush2.msra.mxu0 0.0
        %473 = vmatprep.subr.mxu0 0.0
        %474 = vmatpush2.msra.mxu0 0.0
        %475 = vmatprep.subr.mxu0 0.0
        %476 = vmatpush2.msra.mxu0 0.0
        %477 = vmatprep.subr.mxu0 0.0
        %478 = vmatpush2.msra.mxu0 0.0
        %479 = vmatprep.mubr.f32.mxu0 0.0
        %480 = vmatmul.mubr.f32.gmra.mxu0 %v392
        %v481 = vpop.f32.mrf.mxu0
        %v482 = vadd.f32 %v353, %v481
        %v483 = vpop.f32.mrf.mxu0
        %v484 = vadd.f32 %v353, %v483
        %485 = vmatprep.mubr.f32.mxu0 0.0
        %486 = vmatmul.mubr.f32.gmra.mxu0 %v395
        %v487 = vpop.f32.mrf.mxu0
        %v488 = vadd.f32 %v358, %v487
        %v489 = vpop.f32.mrf.mxu0
        %v490 = vadd.f32 %v358, %v489
        %491 = vmatprep.mubr.f32.mxu0 0.0
        %492 = vmatmul.mubr.f32.gmra.mxu0 %v398
        %v493 = vpop.f32.mrf.mxu0
        %v494 = vadd.f32 %v363, %v493
        %v495 = vpop.f32.mrf.mxu0
        %v496 = vadd.f32 %v363, %v495
        %497 = vmatprep.mubr.f32.mxu0 0.0
        %498 = vmatmul.mubr.f32.gmra.mxu0 %v401
        %v499 = vpop.f32.mrf.mxu0
        %v500 = vadd.f32 %v368, %v499
        %v501 = vpop.f32.mrf.mxu0
        %v502 = vadd.f32 %v368, %v501
        %503 = vmatprep.mubr.f32.mxu0 0.0
        %504 = vmatmul.mubr.f32.gmra.mxu0 %v404
        %v505 = vpop.f32.mrf.mxu0
        %v506 = vadd.f32 %v373, %v505
        %v507 = vpop.f32.mrf.mxu0
        %v508 = vadd.f32 %v373, %v507
        %509 = vmatprep.mubr.f32.mxu0 0.0
        %510 = vmatmul.mubr.f32.gmra.mxu0 %v407
        %v511 = vpop.f32.mrf.mxu0
        %v512 = vadd.f32 %v378, %v511
        %v513 = vpop.f32.mrf.mxu0
        %v514 = vadd.f32 %v378, %v513
        %515 = vmatprep.mubr.f32.mxu0 0.0
        %516 = vmatmul.mubr.f32.gmra.mxu0 %v410
        %v517 = vpop.f32.mrf.mxu0
        %v518 = vadd.f32 %v383, %v517
        %v519 = vpop.f32.mrf.mxu0
        %v520 = vadd.f32 %v383, %v519
        %521 = vmatprep.mubr.f32.mxu0 0.0
        %522 = vmatmul.mubr.f32.gmra.mxu0 %v413
        %v523 = vpop.f32.mrf.mxu0
        %v524 = vadd.f32 %v388, %v523
        %v525 = vpop.f32.mrf.mxu0
        %v526 = vadd.f32 %v388, %v525
        %527 = vdwg.mxu0
        %v528 = vmax.f32 %v482, 0.0
        %v529 = vmax.f32 %v484, 0.0
        %v530 = vmax.f32 %v488, 0.0
        %v531 = vmax.f32 %v490, 0.0
        %v532 = vmax.f32 %v494, 0.0
        %v533 = vmax.f32 %v496, 0.0
        %v534 = vmax.f32 %v500, 0.0
        %v535 = vmax.f32 %v502, 0.0
        %v536 = vmax.f32 %v506, 0.0
        %v537 = vmax.f32 %v508, 0.0
        %v538 = vmax.f32 %v512, 0.0
        %v539 = vmax.f32 %v514, 0.0
        %v540 = vmax.f32 %v518, 0.0
        %v541 = vmax.f32 %v520, 0.0
        %v542 = vmax.f32 %v524, 0.0
        %v543 = vmax.f32 %v526, 0.0
        %v544 = vld [vmem:[%s304] sm:$0xff]
        %v545 = vld [vmem:[%s304 + $0x8] sm:$0xff]
        %v546 = vld [vmem:[%s304 + $0x10] sm:$0xff]
        %v547 = vld [vmem:[%s304 + $0x18] sm:$0xff]
        %v548 = vld [vmem:[%s304 + $0x20] sm:$0xff]
        %v549 = vld [vmem:[%s304 + $0x28] sm:$0xff]
        %v550 = vld [vmem:[%s304 + $0x30] sm:$0xff]
        %v551 = vld [vmem:[%s304 + $0x38] sm:$0xff]
        %552 = vmatprep.subr.mxu0 0.0
        %553 = vmatpush1.msra.mxu0 1.0
        %554 = vmatprep.subr.mxu0 0.0
        %555 = vmatpush1.msra.mxu0 1.0
        %556 = vmatprep.subr.mxu0 0.0
        %557 = vmatpush1.msra.mxu0 1.0
        %558 = vmatprep.subr.mxu0 0.0
        %559 = vmatpush1.msra.mxu0 1.0
        %560 = vmatprep.subr.mxu0 0.0
        %561 = vmatpush1.msra.mxu0 1.0
        %562 = vmatprep.subr.mxu0 0.0
        %563 = vmatpush1.msra.mxu0 1.0
        %564 = vmatprep.subr.mxu0 0.0
        %565 = vmatpush1.msra.mxu0 1.0
        %566 = vmatprep.subr.mxu0 0.0
        %567 = vmatpush1.msra.mxu0 1.0
        %568 = vmatprep.subr.mxu0 0.0
        %569 = vmatpush1.msra.mxu0 1.0
        %570 = vmatprep.subr.mxu0 0.0
        %571 = vmatpush1.msra.mxu0 1.0
        %572 = vmatprep.subr.mxu0 0.0
        %573 = vmatpush1.msra.mxu0 1.0
        %574 = vmatprep.subr.mxu0 0.0
        %575 = vmatpush1.msra.mxu0 1.0
        %576 = vmatprep.subr.mxu0 0.0
        %577 = vmatpush1.msra.mxu0 1.0
        %578 = vmatprep.subr.mxu0 0.0
        %579 = vmatpush1.msra.mxu0 1.0
        %580 = vmatprep.subr.mxu0 0.0
        %581 = vmatpush1.msra.mxu0 1.0
        %582 = vmatprep.subr.mxu0 0.0
        %583 = vmatpush1.msra.mxu0 1.0
        %584 = vmatprep.subr.mxu0 0.0
        %585 = vmatpush2.msra.mxu0 1.0
        %586 = vmatprep.subr.mxu0 0.0
        %587 = vmatpush2.msra.mxu0 1.0
        %588 = vmatprep.subr.mxu0 0.0
        %589 = vmatpush2.msra.mxu0 1.0
        %590 = vmatprep.subr.mxu0 0.0
        %591 = vmatpush2.msra.mxu0 1.0
        %592 = vmatprep.subr.mxu0 0.0
        %593 = vmatpush2.msra.mxu0 1.0
        %594 = vmatprep.subr.mxu0 0.0
        %595 = vmatpush2.msra.mxu0 1.0
        %596 = vmatprep.subr.mxu0 0.0
        %597 = vmatpush2.msra.mxu0 1.0
        %598 = vmatprep.subr.mxu0 0.0
        %599 = vmatpush2.msra.mxu0 1.0
        %600 = vmatprep.subr.mxu0 0.0
        %601 = vmatpush2.msra.mxu0 1.0
        %602 = vmatprep.subr.mxu0 0.0
        %603 = vmatpush2.msra.mxu0 1.0
        %604 = vmatprep.subr.mxu0 0.0
        %605 = vmatpush2.msra.mxu0 1.0
        %606 = vmatprep.subr.mxu0 0.0
        %607 = vmatpush2.msra.mxu0 1.0
        %608 = vmatprep.subr.mxu0 0.0
        %609 = vmatpush2.msra.mxu0 1.0
        %610 = vmatprep.subr.mxu0 0.0
        %611 = vmatpush2.msra.mxu0 1.0
        %612 = vmatprep.subr.mxu0 0.0
        %613 = vmatpush2.msra.mxu0 1.0
        %614 = vmatprep.subr.mxu0 0.0
        %615 = vmatpush2.msra.mxu0 1.0
        %616 = vmatprep.mubr.f32.mxu0 %v529
        %617 = vmatmul.mubr.f32.gmra.mxu0 %v528
        %v618 = vpop.f32.mrf.mxu0
        %v619 = vadd.f32 0.0, %v618
        %v620 = vpop.f32.mrf.mxu0
        %621 = vmatprep.mubr.f32.mxu0 %v531
        %622 = vmatmul.mubr.f32.gmra.mxu0 %v530
        %v623 = vpop.f32.mrf.mxu0
        %v624 = vadd.f32 0.0, %v623
        %v625 = vpop.f32.mrf.mxu0
        %626 = vmatprep.mubr.f32.mxu0 %v533
        %627 = vmatmul.mubr.f32.gmra.mxu0 %v532
        %v628 = vpop.f32.mrf.mxu0
        %v629 = vadd.f32 0.0, %v628
        %v630 = vpop.f32.mrf.mxu0
        %631 = vmatprep.mubr.f32.mxu0 %v535
        %632 = vmatmul.mubr.f32.gmra.mxu0 %v534
        %v633 = vpop.f32.mrf.mxu0
        %v634 = vadd.f32 0.0, %v633
        %v635 = vpop.f32.mrf.mxu0
        %636 = vmatprep.mubr.f32.mxu0 %v537
        %637 = vmatmul.mubr.f32.gmra.mxu0 %v536
        %v638 = vpop.f32.mrf.mxu0
        %v639 = vadd.f32 0.0, %v638
        %v640 = vpop.f32.mrf.mxu0
        %641 = vmatprep.mubr.f32.mxu0 %v539
        %642 = vmatmul.mubr.f32.gmra.mxu0 %v538
        %v643 = vpop.f32.mrf.mxu0
        %v644 = vadd.f32 0.0, %v643
        %v645 = vpop.f32.mrf.mxu0
        %646 = vmatprep.mubr.f32.mxu0 %v541
        %647 = vmatmul.mubr.f32.gmra.mxu0 %v540
        %v648 = vpop.f32.mrf.mxu0
        %v649 = vadd.f32 0.0, %v648
        %v650 = vpop.f32.mrf.mxu0
        %651 = vmatprep.mubr.f32.mxu0 %v543
        %652 = vmatmul.mubr.f32.gmra.mxu0 %v542
        %v653 = vpop.f32.mrf.mxu0
        %v654 = vadd.f32 0.0, %v653
        %v655 = vpop.f32.mrf.mxu0
        %656 = vdwg.mxu0
        %v657 = vadd.f32 %v544, %v619
        %v658 = vadd.f32 %v545, %v624
        %v659 = vadd.f32 %v546, %v629
        %v660 = vadd.f32 %v547, %v634
        %v661 = vadd.f32 %v548, %v639
        %v662 = vadd.f32 %v549, %v644
        %v663 = vadd.f32 %v550, %v649
        %v664 = vadd.f32 %v551, %v654
        %vm665 = vcmask 7168
        %666 = vst.msk [vmem:[%s304] sm:$0xff] %vm665, %v657
        %667 = vst.msk [vmem:[%s304 + $0x8] sm:$0xff] %vm665, %v658
        %668 = vst.msk [vmem:[%s304 + $0x10] sm:$0xff] %vm665, %v659
        %669 = vst.msk [vmem:[%s304 + $0x18] sm:$0xff] %vm665, %v660
        %670 = vst.msk [vmem:[%s304 + $0x20] sm:$0xff] %vm665, %v661
        %671 = vst.msk [vmem:[%s304 + $0x28] sm:$0xff] %vm665, %v662
        %672 = vst.msk [vmem:[%s304 + $0x30] sm:$0xff] %vm665, %v663
        %673 = vst.msk [vmem:[%s304 + $0x38] sm:$0xff] %vm665, %v664
        %p674 = scmp.lt.s32.totalorder %s26, 1
        %s675 = scalar_select %p674, %s26, 1
        %p676 = scmp.lt.s32.totalorder %s27, 0
        %s677 = scalar_select %p676, %s27, 0
        %s678 = smul.addr %s677, 8
        %s679 = smul.addr %s675, 8
        %s680 = sadd.s32 %s678, %s679
        %s681 = smul.addr %s680, 8
        %s682 = scalar_lea.vmem %s4, %s681
        // Predicated region
        $region49: #{tpu_custom_call.1} parent=35 // pred_check
          %p683 = pneg %p162
        $region50: #{tpu_custom_call.1} parent=35 // pred_check_branch
          %685 = sbr.rel (%p683) target = $region52
        $region51: #{tpu_custom_call.1} parent=35 // pred_region
          _
        $region52: #{tpu_custom_call.1} parent=35 // pred_fallthru
          _
      $region36: #{tpu_custom_call.1} parent=5 // pred_fallthru
        _
      %p686 = scmp.le.s32.totalorder 2, %s16
      // Predicated region
      $region53: #{tpu_custom_call.1} parent=5 // pred_check
        %p687 = pneg %p686
      $region54: #{tpu_custom_call.1} parent=5 // pred_check_branch
        %689 = sbr.rel (%p687) target = $region56
      $region55: #{tpu_custom_call.1} parent=5 // pred_region
        %s690 = ssub.s32 %s16, 2
        // Predicated region
        $region57: #{tpu_custom_call.1} parent=55 // pred_check
          %p691 = pneg %p168
        $region58: #{tpu_custom_call.1} parent=55 // pred_check_branch
          %693 = sbr.rel (%p691) target = $region60
        $region59: #{tpu_custom_call.1} parent=55 // pred_region
          %p694 = scmp.lt.s32.totalorder %s29, 1
          %s695 = scalar_select %p694, %s29, 1
          %p696 = scmp.lt.s32.totalorder %s30, 0
          %s697 = scalar_select %p696, %s30, 0
          %s698 = smul.addr %s697, 8
          %s699 = smul.addr %s695, 8
          %s700 = sadd.s32 %s698, %s699
          %s701 = smul.addr %s700, 8
          %s702 = scalar_lea.vmem %s4, %s701
        $region60: #{tpu_custom_call.1} parent=55 // pred_fallthru
          _
      $region56: #{tpu_custom_call.1} parent=5 // pred_fallthru
        _
    $region6: #{tpu_custom_call.1} parent=1 // loop_footer
      %s20 = sadd.s32 1, %s16
    $region7: #{tpu_custom_call.1} parent=1 // loop_footer_branch
      %15 = sbr.rel target = $region3
    $region8: #{tpu_custom_call.1} parent=1 // loop_exit
      _
    %703 = vsyncpa [#allocation3], 1
    %s704 = scalar_lea.sflag [#allocation3], 1
    %705 = vsyncpa %s704, 1
    %706 = vsyncpa [#allocation5], 1
    %s707 = scalar_lea.sflag [#allocation5], 1
    %708 = vsyncpa %s707, 1

</llo_original>
